<compile_context>
chip_gen: v5e
topology: v5e:2x2
jax: 0.10.0
libtpu: 0.0.40
codegen_flags: <defaults>
</compile_context>

<pallas_src>
import functools

import jax
import jax.numpy as jnp
from jax import lax
from jax.experimental import pallas as pl
from jax.experimental.pallas import tpu as pltpu


def _round_up(x, m):
    return ((x + m - 1) // m) * m


def _choose_block_batch(bp, max_tb=128):
    """Batch elements per grid step.

    `bp` is the padded batch (multiple of 8).  Pick the largest multiple-of-8
    divisor of bp that still leaves >= 2 grid steps (so both TensorCores get
    work on v7x) and stays modest; fall back to the whole batch otherwise.
    """
    if bp <= 8:
        return bp
    best = 8
    tb = 8
    while tb <= min(bp // 2, max_tb):
        if bp % tb == 0:
            best = tb
        tb += 8
    return best


def encoder_kernel(tok_ref, table_ref, b_ref, out_ref, *, seq_len, block_batch):
    # tok_ref  : (Bp*S,) int32  SMEM  scalar-prefetched token ids (whole batch)
    # table_ref: (Vp, Hp) f32   VMEM  fused table  E @ W^T  (grid-invariant)
    # b_ref    : (1, Hp)  f32   VMEM  Linear bias (zero padded)
    # out_ref  : (TB, Hp) f32   VMEM  per-batch-element max over sequence (+ bias)
    hp = table_ref.shape[1]
    i = pl.program_id(0)
    bias = b_ref[...]  # hoisted load, (1, Hp)

    for bi in range(block_batch):  # static unrolled loop over the batch tile
        base = (i * block_batch + bi) * seq_len

        def body(s, acc):
            tok = tok_ref[base + s]                  # cheap SMEM scalar read
            row = table_ref[pl.ds(tok, 1), :]        # (1, Hp) dynamic row gather
            return jnp.maximum(acc, row)

        m = lax.fori_loop(0, seq_len, body,
                          jnp.full((1, hp), -jnp.inf, jnp.float32),
                          unroll=True)

        # Dropout(0.5) is identity in eval mode.
        # TODO(synk): training-mode dropout (random mask + 1/(1-p) scaling) not implemented.
        # Bias add hoisted after the max: max(x + b) == max(x) + b.
        out_ref[pl.ds(bi, 1), :] = (m + bias).astype(out_ref.dtype)


def sentence_encoder_forward(tokens, emb_table, w, b, *, block_batch=None):
    """Eval-mode SentenceEncoder forward: tokens (B, S) int32 -> (B, H) float32."""
    B, S = tokens.shape
    V, H = emb_table.shape

    Hp = _round_up(H, 128)   # lane alignment
    Vp = _round_up(V, 8)     # sublane alignment for table rows
    Bp = _round_up(B, 8)     # output block (8,128) constraint with small tiles

    # One-time parameter prep (grid-invariant):
    #   fold the Linear weight into the embedding table:  (onehot @ E) @ W^T == onehot @ (E @ W^T)
    fused = jnp.dot(emb_table.astype(jnp.float32), w.astype(jnp.float32).T,
                    precision=lax.Precision.HIGHEST)                    # (V, H), done once
    table_p = jnp.zeros((Vp, Hp), jnp.float32).at[:V, :H].set(fused)
    b_p = jnp.zeros((1, Hp), jnp.float32).at[0, :H].set(b.astype(jnp.float32))

    # Pad batch with token id 0 (padding_idx row); padded rows are sliced off at the end.
    # TODO(synk): no bounds check on token ids (PyTorch nn.Embedding would raise on OOB ids).
    tok_flat = jnp.zeros((Bp * S,), jnp.int32).at[:B * S].set(
        tokens.reshape(B * S).astype(jnp.int32))

    TB = _choose_block_batch(Bp) if block_batch is None else block_batch
    assert Bp % TB == 0
    grid = (Bp // TB,)

    # Raise the scoped VMEM limit only if a large fused table needs it
    # (scoped defaults: 16 MiB v5e / 32 MiB v6e / 32-of-64 MiB v7x).
    table_bytes = Vp * Hp * 4
    cp_kwargs = dict(dimension_semantics=("parallel",))
    if 2 * table_bytes > (24 << 20):
        cp_kwargs["vmem_limit_bytes"] = min(2 * table_bytes + (8 << 20), 128 << 20)

    kernel = functools.partial(encoder_kernel, seq_len=S, block_batch=TB)

    out_p = pl.pallas_call(
        kernel,
        out_shape=jax.ShapeDtypeStruct((Bp, Hp), jnp.float32),
        grid_spec=pltpu.PrefetchScalarGridSpec(
            num_scalar_prefetch=1,          # token ids -> SMEM, available every step
            grid=grid,
            in_specs=[
                # Grid-invariant fused table and bias: constant index_map, fetched once.
                pl.BlockSpec((Vp, Hp), lambda i, tok: (0, 0)),
                pl.BlockSpec((1, Hp), lambda i, tok: (0, 0)),
            ],
            # Lane-dense 2-D output slab (last dim Hp is a multiple of 128).
            out_specs=pl.BlockSpec((TB, Hp), lambda i, tok: (i, 0)),
        ),
        compiler_params=pltpu.CompilerParams(**cp_kwargs),
    )(tok_flat, table_p, b_p)

    return out_p[:B, :H]  # (B, H) — matches PyTorch .squeeze()


if __name__ == "__main__":
    # Small, module-consistent shapes.
    B, S = 2, 8          # batch, sequence length
    H = 32               # hidden_size
    V = 30               # vocab_size

    key = jax.random.PRNGKey(0)
    k_emb, k_w, k_b, k_tok = jax.random.split(key, 4)

    # Deterministic parameter init (synthetic; no checkpoint).
    emb_table = jax.random.normal(k_emb, (V, H), dtype=jnp.float32)
    emb_table = emb_table.at[0].set(0.0)                   # padding_idx=0 -> zero row
    limit = 1.0 / jnp.sqrt(jnp.float32(H))                 # PyTorch Linear default range
    w = jax.random.uniform(k_w, (H, H), minval=-limit, maxval=limit, dtype=jnp.float32)
    b = jax.random.uniform(k_b, (H,), minval=-limit, maxval=limit, dtype=jnp.float32)

    tokens = jax.random.randint(k_tok, (B, S), minval=0, maxval=V, dtype=jnp.int32)

    out = sentence_encoder_forward(tokens, emb_table, w, b)
    out = jax.block_until_ready(out)

    # Pure-JAX reference of the same math (eval-mode forward).
    emb = jnp.take(emb_table, tokens, axis=0)                                   # (B, S, H)
    ref = jnp.max(jnp.einsum("bsh,oh->bso", emb, w,
                             precision=jax.lax.Precision.HIGHEST) + b, axis=1)  # (B, H)

    assert out.shape == (B, H)
    assert jnp.allclose(out, ref, atol=1e-4, rtol=1e-4)

    print("KERNEL_OK")
</pallas_src>

<mosaic_0001>
module attributes {stable_mosaic.version = 11 : i64} {
  func.func @encoder_kernel(%arg0: i32, %arg1: memref<64xi32, #tpu.memory_space<smem>>, %arg2: memref<32x128xf32, #tpu.memory_space<vmem>>, %arg3: memref<1x128xf32, #tpu.memory_space<vmem>>, %arg4: memref<8x128xf32, #tpu.memory_space<vmem>>) attributes {dimension_semantics = [#tpu.dimension_semantics<parallel>], iteration_bounds = array<i64: 1>, scalar_prefetch = 1 : i64, scratch_operands = 0 : i64, tpu.core_type = #tpu.core_type<tc>, window_params = [{pipeline_mode = #tpu.pipeline_mode<synchronous>, transform_indices = @transform_0, window_bounds = array<i64: 32, 128>}, {pipeline_mode = #tpu.pipeline_mode<synchronous>, transform_indices = @transform_1, window_bounds = array<i64: 1, 128>}, {transform_indices = @transform_2, window_bounds = array<i64: 8, 128>}]} {
    %c0 = arith.constant 0 : index
    %c0_0 = arith.constant 0 : index
    %0 = vector.load %arg3[%c0, %c0_0] : memref<1x128xf32, #tpu.memory_space<vmem>>, vector<1x128xf32>
    %c8_i32 = arith.constant 8 : i32
    %1 = arith.muli %arg0, %c8_i32 : i32
    %c0_i32 = arith.constant 0 : i32
    %2 = arith.addi %1, %c0_i32 : i32
    %c8_i32_1 = arith.constant 8 : i32
    %3 = arith.muli %2, %c8_i32_1 : i32
    %cst = arith.constant 0xFF800000 : f32
    %4 = vector.broadcast %cst : f32 to vector<1x128xf32>
    %c0_i32_2 = arith.constant 0 : i32
    %5 = arith.addi %3, %c0_i32_2 : i32
    %6 = arith.index_cast %5 : i32 to index
    %7 = memref.load %arg1[%6] : memref<64xi32, #tpu.memory_space<smem>>
    %8 = arith.index_cast %7 : i32 to index
    %c0_3 = arith.constant 0 : index
    %9 = vector.load %arg2[%8, %c0_3] : memref<32x128xf32, #tpu.memory_space<vmem>>, vector<1x128xf32>
    %10 = arith.maximumf %4, %9 : vector<1x128xf32>
    %c1_i32 = arith.constant 1 : i32
    %11 = arith.addi %3, %c1_i32 : i32
    %12 = arith.index_cast %11 : i32 to index
    %13 = memref.load %arg1[%12] : memref<64xi32, #tpu.memory_space<smem>>
    %14 = arith.index_cast %13 : i32 to index
    %c0_4 = arith.constant 0 : index
    %15 = vector.load %arg2[%14, %c0_4] : memref<32x128xf32, #tpu.memory_space<vmem>>, vector<1x128xf32>
    %16 = arith.maximumf %10, %15 : vector<1x128xf32>
    %c2_i32 = arith.constant 2 : i32
    %17 = arith.addi %3, %c2_i32 : i32
    %18 = arith.index_cast %17 : i32 to index
    %19 = memref.load %arg1[%18] : memref<64xi32, #tpu.memory_space<smem>>
    %20 = arith.index_cast %19 : i32 to index
    %c0_5 = arith.constant 0 : index
    %21 = vector.load %arg2[%20, %c0_5] : memref<32x128xf32, #tpu.memory_space<vmem>>, vector<1x128xf32>
    %22 = arith.maximumf %16, %21 : vector<1x128xf32>
    %c3_i32 = arith.constant 3 : i32
    %23 = arith.addi %3, %c3_i32 : i32
    %24 = arith.index_cast %23 : i32 to index
    %25 = memref.load %arg1[%24] : memref<64xi32, #tpu.memory_space<smem>>
    %26 = arith.index_cast %25 : i32 to index
    %c0_6 = arith.constant 0 : index
    %27 = vector.load %arg2[%26, %c0_6] : memref<32x128xf32, #tpu.memory_space<vmem>>, vector<1x128xf32>
    %28 = arith.maximumf %22, %27 : vector<1x128xf32>
    %c4_i32 = arith.constant 4 : i32
    %29 = arith.addi %3, %c4_i32 : i32
    %30 = arith.index_cast %29 : i32 to index
    %31 = memref.load %arg1[%30] : memref<64xi32, #tpu.memory_space<smem>>
    %32 = arith.index_cast %31 : i32 to index
    %c0_7 = arith.constant 0 : index
    %33 = vector.load %arg2[%32, %c0_7] : memref<32x128xf32, #tpu.memory_space<vmem>>, vector<1x128xf32>
    %34 = arith.maximumf %28, %33 : vector<1x128xf32>
    %c5_i32 = arith.constant 5 : i32
    %35 = arith.addi %3, %c5_i32 : i32
    %36 = arith.index_cast %35 : i32 to index
    %37 = memref.load %arg1[%36] : memref<64xi32, #tpu.memory_space<smem>>
    %38 = arith.index_cast %37 : i32 to index
    %c0_8 = arith.constant 0 : index
    %39 = vector.load %arg2[%38, %c0_8] : memref<32x128xf32, #tpu.memory_space<vmem>>, vector<1x128xf32>
    %40 = arith.maximumf %34, %39 : vector<1x128xf32>
    %c6_i32 = arith.constant 6 : i32
    %41 = arith.addi %3, %c6_i32 : i32
    %42 = arith.index_cast %41 : i32 to index
    %43 = memref.load %arg1[%42] : memref<64xi32, #tpu.memory_space<smem>>
    %44 = arith.index_cast %43 : i32 to index
    %c0_9 = arith.constant 0 : index
    %45 = vector.load %arg2[%44, %c0_9] : memref<32x128xf32, #tpu.memory_space<vmem>>, vector<1x128xf32>
    %46 = arith.maximumf %40, %45 : vector<1x128xf32>
    %c7_i32 = arith.constant 7 : i32
    %47 = arith.addi %3, %c7_i32 : i32
    %48 = arith.index_cast %47 : i32 to index
    %49 = memref.load %arg1[%48] : memref<64xi32, #tpu.memory_space<smem>>
    %50 = arith.index_cast %49 : i32 to index
    %c0_10 = arith.constant 0 : index
    %51 = vector.load %arg2[%50, %c0_10] : memref<32x128xf32, #tpu.memory_space<vmem>>, vector<1x128xf32>
    %52 = arith.maximumf %46, %51 : vector<1x128xf32>
    %c8_i32_11 = arith.constant 8 : i32
    %53 = arith.addf %52, %0 : vector<1x128xf32>
    %c0_12 = arith.constant 0 : index
    %c0_13 = arith.constant 0 : index
    %54 = vector.load %arg4[%c0_12, %c0_13] : memref<8x128xf32, #tpu.memory_space<vmem>>, vector<1x128xf32>
    tpu.vector_store %arg4[%c0_12, %c0_13], %53 {strides = array<i32>} : memref<8x128xf32, #tpu.memory_space<vmem>>, vector<1x128xf32>,
    %c8_i32_14 = arith.constant 8 : i32
    %55 = arith.muli %arg0, %c8_i32_14 : i32
    %c1_i32_15 = arith.constant 1 : i32
    %56 = arith.addi %55, %c1_i32_15 : i32
    %c8_i32_16 = arith.constant 8 : i32
    %57 = arith.muli %56, %c8_i32_16 : i32
    %cst_17 = arith.constant 0xFF800000 : f32
    %58 = vector.broadcast %cst_17 : f32 to vector<1x128xf32>
    %c0_i32_18 = arith.constant 0 : i32
    %59 = arith.addi %57, %c0_i32_18 : i32
    %60 = arith.index_cast %59 : i32 to index
    %61 = memref.load %arg1[%60] : memref<64xi32, #tpu.memory_space<smem>>
    %62 = arith.index_cast %61 : i32 to index
    %c0_19 = arith.constant 0 : index
    %63 = vector.load %arg2[%62, %c0_19] : memref<32x128xf32, #tpu.memory_space<vmem>>, vector<1x128xf32>
    %64 = arith.maximumf %58, %63 : vector<1x128xf32>
    %c1_i32_20 = arith.constant 1 : i32
    %65 = arith.addi %57, %c1_i32_20 : i32
    %66 = arith.index_cast %65 : i32 to index
    %67 = memref.load %arg1[%66] : memref<64xi32, #tpu.memory_space<smem>>
    %68 = arith.index_cast %67 : i32 to index
    %c0_21 = arith.constant 0 : index
    %69 = vector.load %arg2[%68, %c0_21] : memref<32x128xf32, #tpu.memory_space<vmem>>, vector<1x128xf32>
    %70 = arith.maximumf %64, %69 : vector<1x128xf32>
    %c2_i32_22 = arith.constant 2 : i32
    %71 = arith.addi %57, %c2_i32_22 : i32
    %72 = arith.index_cast %71 : i32 to index
    %73 = memref.load %arg1[%72] : memref<64xi32, #tpu.memory_space<smem>>
    %74 = arith.index_cast %73 : i32 to index
    %c0_23 = arith.constant 0 : index
    %75 = vector.load %arg2[%74, %c0_23] : memref<32x128xf32, #tpu.memory_space<vmem>>, vector<1x128xf32>
    %76 = arith.maximumf %70, %75 : vector<1x128xf32>
    %c3_i32_24 = arith.constant 3 : i32
    %77 = arith.addi %57, %c3_i32_24 : i32
    %78 = arith.index_cast %77 : i32 to index
    %79 = memref.load %arg1[%78] : memref<64xi32, #tpu.memory_space<smem>>
    %80 = arith.index_cast %79 : i32 to index
    %c0_25 = arith.constant 0 : index
    %81 = vector.load %arg2[%80, %c0_25] : memref<32x128xf32, #tpu.memory_space<vmem>>, vector<1x128xf32>
    %82 = arith.maximumf %76, %81 : vector<1x128xf32>
    %c4_i32_26 = arith.constant 4 : i32
    %83 = arith.addi %57, %c4_i32_26 : i32
    %84 = arith.index_cast %83 : i32 to index
    %85 = memref.load %arg1[%84] : memref<64xi32, #tpu.memory_space<smem>>
    %86 = arith.index_cast %85 : i32 to index
    %c0_27 = arith.constant 0 : index
    %87 = vector.load %arg2[%86, %c0_27] : memref<32x128xf32, #tpu.memory_space<vmem>>, vector<1x128xf32>
    %88 = arith.maximumf %82, %87 : vector<1x128xf32>
    %c5_i32_28 = arith.constant 5 : i32
    %89 = arith.addi %57, %c5_i32_28 : i32
    %90 = arith.index_cast %89 : i32 to index
    %91 = memref.load %arg1[%90] : memref<64xi32, #tpu.memory_space<smem>>
    %92 = arith.index_cast %91 : i32 to index
    %c0_29 = arith.constant 0 : index
    %93 = vector.load %arg2[%92, %c0_29] : memref<32x128xf32, #tpu.memory_space<vmem>>, vector<1x128xf32>
    %94 = arith.maximumf %88, %93 : vector<1x128xf32>
    %c6_i32_30 = arith.constant 6 : i32
    %95 = arith.addi %57, %c6_i32_30 : i32
    %96 = arith.index_cast %95 : i32 to index
    %97 = memref.load %arg1[%96] : memref<64xi32, #tpu.memory_space<smem>>
    %98 = arith.index_cast %97 : i32 to index
    %c0_31 = arith.constant 0 : index
    %99 = vector.load %arg2[%98, %c0_31] : memref<32x128xf32, #tpu.memory_space<vmem>>, vector<1x128xf32>
    %100 = arith.maximumf %94, %99 : vector<1x128xf32>
    %c7_i32_32 = arith.constant 7 : i32
    %101 = arith.addi %57, %c7_i32_32 : i32
    %102 = arith.index_cast %101 : i32 to index
    %103 = memref.load %arg1[%102] : memref<64xi32, #tpu.memory_space<smem>>
    %104 = arith.index_cast %103 : i32 to index
    %c0_33 = arith.constant 0 : index
    %105 = vector.load %arg2[%104, %c0_33] : memref<32x128xf32, #tpu.memory_space<vmem>>, vector<1x128xf32>
    %106 = arith.maximumf %100, %105 : vector<1x128xf32>
    %c8_i32_34 = arith.constant 8 : i32
    %107 = arith.addf %106, %0 : vector<1x128xf32>
    %c1 = arith.constant 1 : index
    %c0_35 = arith.constant 0 : index
    %108 = vector.load %arg4[%c1, %c0_35] : memref<8x128xf32, #tpu.memory_space<vmem>>, vector<1x128xf32>
    tpu.vector_store %arg4[%c1, %c0_35], %107 {strides = array<i32>} : memref<8x128xf32, #tpu.memory_space<vmem>>, vector<1x128xf32>,
    %c8_i32_36 = arith.constant 8 : i32
    %109 = arith.muli %arg0, %c8_i32_36 : i32
    %c2_i32_37 = arith.constant 2 : i32
    %110 = arith.addi %109, %c2_i32_37 : i32
    %c8_i32_38 = arith.constant 8 : i32
    %111 = arith.muli %110, %c8_i32_38 : i32
    %cst_39 = arith.constant 0xFF800000 : f32
    %112 = vector.broadcast %cst_39 : f32 to vector<1x128xf32>
    %c0_i32_40 = arith.constant 0 : i32
    %113 = arith.addi %111, %c0_i32_40 : i32
    %114 = arith.index_cast %113 : i32 to index
    %115 = memref.load %arg1[%114] : memref<64xi32, #tpu.memory_space<smem>>
    %116 = arith.index_cast %115 : i32 to index
    %c0_41 = arith.constant 0 : index
    %117 = vector.load %arg2[%116, %c0_41] : memref<32x128xf32, #tpu.memory_space<vmem>>, vector<1x128xf32>
    %118 = arith.maximumf %112, %117 : vector<1x128xf32>
    %c1_i32_42 = arith.constant 1 : i32
    %119 = arith.addi %111, %c1_i32_42 : i32
    %120 = arith.index_cast %119 : i32 to index
    %121 = memref.load %arg1[%120] : memref<64xi32, #tpu.memory_space<smem>>
    %122 = arith.index_cast %121 : i32 to index
    %c0_43 = arith.constant 0 : index
    %123 = vector.load %arg2[%122, %c0_43] : memref<32x128xf32, #tpu.memory_space<vmem>>, vector<1x128xf32>
    %124 = arith.maximumf %118, %123 : vector<1x128xf32>
    %c2_i32_44 = arith.constant 2 : i32
    %125 = arith.addi %111, %c2_i32_44 : i32
    %126 = arith.index_cast %125 : i32 to index
    %127 = memref.load %arg1[%126] : memref<64xi32, #tpu.memory_space<smem>>
    %128 = arith.index_cast %127 : i32 to index
    %c0_45 = arith.constant 0 : index
    %129 = vector.load %arg2[%128, %c0_45] : memref<32x128xf32, #tpu.memory_space<vmem>>, vector<1x128xf32>
    %130 = arith.maximumf %124, %129 : vector<1x128xf32>
    %c3_i32_46 = arith.constant 3 : i32
    %131 = arith.addi %111, %c3_i32_46 : i32
    %132 = arith.index_cast %131 : i32 to index
    %133 = memref.load %arg1[%132] : memref<64xi32, #tpu.memory_space<smem>>
    %134 = arith.index_cast %133 : i32 to index
    %c0_47 = arith.constant 0 : index
    %135 = vector.load %arg2[%134, %c0_47] : memref<32x128xf32, #tpu.memory_space<vmem>>, vector<1x128xf32>
    %136 = arith.maximumf %130, %135 : vector<1x128xf32>
    %c4_i32_48 = arith.constant 4 : i32
    %137 = arith.addi %111, %c4_i32_48 : i32
    %138 = arith.index_cast %137 : i32 to index
    %139 = memref.load %arg1[%138] : memref<64xi32, #tpu.memory_space<smem>>
    %140 = arith.index_cast %139 : i32 to index
    %c0_49 = arith.constant 0 : index
    %141 = vector.load %arg2[%140, %c0_49] : memref<32x128xf32, #tpu.memory_space<vmem>>, vector<1x128xf32>
    %142 = arith.maximumf %136, %141 : vector<1x128xf32>
    %c5_i32_50 = arith.constant 5 : i32
    %143 = arith.addi %111, %c5_i32_50 : i32
    %144 = arith.index_cast %143 : i32 to index
    %145 = memref.load %arg1[%144] : memref<64xi32, #tpu.memory_space<smem>>
    %146 = arith.index_cast %145 : i32 to index
    %c0_51 = arith.constant 0 : index
    %147 = vector.load %arg2[%146, %c0_51] : memref<32x128xf32, #tpu.memory_space<vmem>>, vector<1x128xf32>
    %148 = arith.maximumf %142, %147 : vector<1x128xf32>
    %c6_i32_52 = arith.constant 6 : i32
    %149 = arith.addi %111, %c6_i32_52 : i32
    %150 = arith.index_cast %149 : i32 to index
    %151 = memref.load %arg1[%150] : memref<64xi32, #tpu.memory_space<smem>>
    %152 = arith.index_cast %151 : i32 to index
    %c0_53 = arith.constant 0 : index
    %153 = vector.load %arg2[%152, %c0_53] : memref<32x128xf32, #tpu.memory_space<vmem>>, vector<1x128xf32>
    %154 = arith.maximumf %148, %153 : vector<1x128xf32>
    %c7_i32_54 = arith.constant 7 : i32
    %155 = arith.addi %111, %c7_i32_54 : i32
    %156 = arith.index_cast %155 : i32 to index
    %157 = memref.load %arg1[%156] : memref<64xi32, #tpu.memory_space<smem>>
    %158 = arith.index_cast %157 : i32 to index
    %c0_55 = arith.constant 0 : index
    %159 = vector.load %arg2[%158, %c0_55] : memref<32x128xf32, #tpu.memory_space<vmem>>, vector<1x128xf32>
    %160 = arith.maximumf %154, %159 : vector<1x128xf32>
    %c8_i32_56 = arith.constant 8 : i32
    %161 = arith.addf %160, %0 : vector<1x128xf32>
    %c2 = arith.constant 2 : index
    %c0_57 = arith.constant 0 : index
    %162 = vector.load %arg4[%c2, %c0_57] : memref<8x128xf32, #tpu.memory_space<vmem>>, vector<1x128xf32>
    tpu.vector_store %arg4[%c2, %c0_57], %161 {strides = array<i32>} : memref<8x128xf32, #tpu.memory_space<vmem>>, vector<1x128xf32>,
    %c8_i32_58 = arith.constant 8 : i32
    %163 = arith.muli %arg0, %c8_i32_58 : i32
    %c3_i32_59 = arith.constant 3 : i32
    %164 = arith.addi %163, %c3_i32_59 : i32
    %c8_i32_60 = arith.constant 8 : i32
    %165 = arith.muli %164, %c8_i32_60 : i32
    %cst_61 = arith.constant 0xFF800000 : f32
    %166 = vector.broadcast %cst_61 : f32 to vector<1x128xf32>
    %c0_i32_62 = arith.constant 0 : i32
    %167 = arith.addi %165, %c0_i32_62 : i32
    %168 = arith.index_cast %167 : i32 to index
    %169 = memref.load %arg1[%168] : memref<64xi32, #tpu.memory_space<smem>>
    %170 = arith.index_cast %169 : i32 to index
    %c0_63 = arith.constant 0 : index
    %171 = vector.load %arg2[%170, %c0_63] : memref<32x128xf32, #tpu.memory_space<vmem>>, vector<1x128xf32>
    %172 = arith.maximumf %166, %171 : vector<1x128xf32>
    %c1_i32_64 = arith.constant 1 : i32
    %173 = arith.addi %165, %c1_i32_64 : i32
    %174 = arith.index_cast %173 : i32 to index
    %175 = memref.load %arg1[%174] : memref<64xi32, #tpu.memory_space<smem>>
    %176 = arith.index_cast %175 : i32 to index
    %c0_65 = arith.constant 0 : index
    %177 = vector.load %arg2[%176, %c0_65] : memref<32x128xf32, #tpu.memory_space<vmem>>, vector<1x128xf32>
    %178 = arith.maximumf %172, %177 : vector<1x128xf32>
    %c2_i32_66 = arith.constant 2 : i32
    %179 = arith.addi %165, %c2_i32_66 : i32
    %180 = arith.index_cast %179 : i32 to index
    %181 = memref.load %arg1[%180] : memref<64xi32, #tpu.memory_space<smem>>
    %182 = arith.index_cast %181 : i32 to index
    %c0_67 = arith.constant 0 : index
    %183 = vector.load %arg2[%182, %c0_67] : memref<32x128xf32, #tpu.memory_space<vmem>>, vector<1x128xf32>
    %184 = arith.maximumf %178, %183 : vector<1x128xf32>
    %c3_i32_68 = arith.constant 3 : i32
    %185 = arith.addi %165, %c3_i32_68 : i32
    %186 = arith.index_cast %185 : i32 to index
    %187 = memref.load %arg1[%186] : memref<64xi32, #tpu.memory_space<smem>>
    %188 = arith.index_cast %187 : i32 to index
    %c0_69 = arith.constant 0 : index
    %189 = vector.load %arg2[%188, %c0_69] : memref<32x128xf32, #tpu.memory_space<vmem>>, vector<1x128xf32>
    %190 = arith.maximumf %184, %189 : vector<1x128xf32>
    %c4_i32_70 = arith.constant 4 : i32
    %191 = arith.addi %165, %c4_i32_70 : i32
    %192 = arith.index_cast %191 : i32 to index
    %193 = memref.load %arg1[%192] : memref<64xi32, #tpu.memory_space<smem>>
    %194 = arith.index_cast %193 : i32 to index
    %c0_71 = arith.constant 0 : index
    %195 = vector.load %arg2[%194, %c0_71] : memref<32x128xf32, #tpu.memory_space<vmem>>, vector<1x128xf32>
    %196 = arith.maximumf %190, %195 : vector<1x128xf32>
    %c5_i32_72 = arith.constant 5 : i32
    %197 = arith.addi %165, %c5_i32_72 : i32
    %198 = arith.index_cast %197 : i32 to index
    %199 = memref.load %arg1[%198] : memref<64xi32, #tpu.memory_space<smem>>
    %200 = arith.index_cast %199 : i32 to index
    %c0_73 = arith.constant 0 : index
    %201 = vector.load %arg2[%200, %c0_73] : memref<32x128xf32, #tpu.memory_space<vmem>>, vector<1x128xf32>
    %202 = arith.maximumf %196, %201 : vector<1x128xf32>
    %c6_i32_74 = arith.constant 6 : i32
    %203 = arith.addi %165, %c6_i32_74 : i32
    %204 = arith.index_cast %203 : i32 to index
    %205 = memref.load %arg1[%204] : memref<64xi32, #tpu.memory_space<smem>>
    %206 = arith.index_cast %205 : i32 to index
    %c0_75 = arith.constant 0 : index
    %207 = vector.load %arg2[%206, %c0_75] : memref<32x128xf32, #tpu.memory_space<vmem>>, vector<1x128xf32>
    %208 = arith.maximumf %202, %207 : vector<1x128xf32>
    %c7_i32_76 = arith.constant 7 : i32
    %209 = arith.addi %165, %c7_i32_76 : i32
    %210 = arith.index_cast %209 : i32 to index
    %211 = memref.load %arg1[%210] : memref<64xi32, #tpu.memory_space<smem>>
    %212 = arith.index_cast %211 : i32 to index
    %c0_77 = arith.constant 0 : index
    %213 = vector.load %arg2[%212, %c0_77] : memref<32x128xf32, #tpu.memory_space<vmem>>, vector<1x128xf32>
    %214 = arith.maximumf %208, %213 : vector<1x128xf32>
    %c8_i32_78 = arith.constant 8 : i32
    %215 = arith.addf %214, %0 : vector<1x128xf32>
    %c3 = arith.constant 3 : index
    %c0_79 = arith.constant 0 : index
    %216 = vector.load %arg4[%c3, %c0_79] : memref<8x128xf32, #tpu.memory_space<vmem>>, vector<1x128xf32>
    tpu.vector_store %arg4[%c3, %c0_79], %215 {strides = array<i32>} : memref<8x128xf32, #tpu.memory_space<vmem>>, vector<1x128xf32>,
    %c8_i32_80 = arith.constant 8 : i32
    %217 = arith.muli %arg0, %c8_i32_80 : i32
    %c4_i32_81 = arith.constant 4 : i32
    %218 = arith.addi %217, %c4_i32_81 : i32
    %c8_i32_82 = arith.constant 8 : i32
    %219 = arith.muli %218, %c8_i32_82 : i32
    %cst_83 = arith.constant 0xFF800000 : f32
    %220 = vector.broadcast %cst_83 : f32 to vector<1x128xf32>
    %c0_i32_84 = arith.constant 0 : i32
    %221 = arith.addi %219, %c0_i32_84 : i32
    %222 = arith.index_cast %221 : i32 to index
    %223 = memref.load %arg1[%222] : memref<64xi32, #tpu.memory_space<smem>>
    %224 = arith.index_cast %223 : i32 to index
    %c0_85 = arith.constant 0 : index
    %225 = vector.load %arg2[%224, %c0_85] : memref<32x128xf32, #tpu.memory_space<vmem>>, vector<1x128xf32>
    %226 = arith.maximumf %220, %225 : vector<1x128xf32>
    %c1_i32_86 = arith.constant 1 : i32
    %227 = arith.addi %219, %c1_i32_86 : i32
    %228 = arith.index_cast %227 : i32 to index
    %229 = memref.load %arg1[%228] : memref<64xi32, #tpu.memory_space<smem>>
    %230 = arith.index_cast %229 : i32 to index
    %c0_87 = arith.constant 0 : index
    %231 = vector.load %arg2[%230, %c0_87] : memref<32x128xf32, #tpu.memory_space<vmem>>, vector<1x128xf32>
    %232 = arith.maximumf %226, %231 : vector<1x128xf32>
    %c2_i32_88 = arith.constant 2 : i32
    %233 = arith.addi %219, %c2_i32_88 : i32
    %234 = arith.index_cast %233 : i32 to index
    %235 = memref.load %arg1[%234] : memref<64xi32, #tpu.memory_space<smem>>
    %236 = arith.index_cast %235 : i32 to index
    %c0_89 = arith.constant 0 : index
    %237 = vector.load %arg2[%236, %c0_89] : memref<32x128xf32, #tpu.memory_space<vmem>>, vector<1x128xf32>
    %238 = arith.maximumf %232, %237 : vector<1x128xf32>
    %c3_i32_90 = arith.constant 3 : i32
    %239 = arith.addi %219, %c3_i32_90 : i32
    %240 = arith.index_cast %239 : i32 to index
    %241 = memref.load %arg1[%240] : memref<64xi32, #tpu.memory_space<smem>>
    %242 = arith.index_cast %241 : i32 to index
    %c0_91 = arith.constant 0 : index
    %243 = vector.load %arg2[%242, %c0_91] : memref<32x128xf32, #tpu.memory_space<vmem>>, vector<1x128xf32>
    %244 = arith.maximumf %238, %243 : vector<1x128xf32>
    %c4_i32_92 = arith.constant 4 : i32
    %245 = arith.addi %219, %c4_i32_92 : i32
    %246 = arith.index_cast %245 : i32 to index
    %247 = memref.load %arg1[%246] : memref<64xi32, #tpu.memory_space<smem>>
    %248 = arith.index_cast %247 : i32 to index
    %c0_93 = arith.constant 0 : index
    %249 = vector.load %arg2[%248, %c0_93] : memref<32x128xf32, #tpu.memory_space<vmem>>, vector<1x128xf32>
    %250 = arith.maximumf %244, %249 : vector<1x128xf32>
    %c5_i32_94 = arith.constant 5 : i32
    %251 = arith.addi %219, %c5_i32_94 : i32
    %252 = arith.index_cast %251 : i32 to index
    %253 = memref.load %arg1[%252] : memref<64xi32, #tpu.memory_space<smem>>
    %254 = arith.index_cast %253 : i32 to index
    %c0_95 = arith.constant 0 : index
    %255 = vector.load %arg2[%254, %c0_95] : memref<32x128xf32, #tpu.memory_space<vmem>>, vector<1x128xf32>
    %256 = arith.maximumf %250, %255 : vector<1x128xf32>
    %c6_i32_96 = arith.constant 6 : i32
    %257 = arith.addi %219, %c6_i32_96 : i32
    %258 = arith.index_cast %257 : i32 to index
    %259 = memref.load %arg1[%258] : memref<64xi32, #tpu.memory_space<smem>>
    %260 = arith.index_cast %259 : i32 to index
    %c0_97 = arith.constant 0 : index
    %261 = vector.load %arg2[%260, %c0_97] : memref<32x128xf32, #tpu.memory_space<vmem>>, vector<1x128xf32>
    %262 = arith.maximumf %256, %261 : vector<1x128xf32>
    %c7_i32_98 = arith.constant 7 : i32
    %263 = arith.addi %219, %c7_i32_98 : i32
    %264 = arith.index_cast %263 : i32 to index
    %265 = memref.load %arg1[%264] : memref<64xi32, #tpu.memory_space<smem>>
    %266 = arith.index_cast %265 : i32 to index
    %c0_99 = arith.constant 0 : index
    %267 = vector.load %arg2[%266, %c0_99] : memref<32x128xf32, #tpu.memory_space<vmem>>, vector<1x128xf32>
    %268 = arith.maximumf %262, %267 : vector<1x128xf32>
    %c8_i32_100 = arith.constant 8 : i32
    %269 = arith.addf %268, %0 : vector<1x128xf32>
    %c4 = arith.constant 4 : index
    %c0_101 = arith.constant 0 : index
    %270 = vector.load %arg4[%c4, %c0_101] : memref<8x128xf32, #tpu.memory_space<vmem>>, vector<1x128xf32>
    tpu.vector_store %arg4[%c4, %c0_101], %269 {strides = array<i32>} : memref<8x128xf32, #tpu.memory_space<vmem>>, vector<1x128xf32>,
    %c8_i32_102 = arith.constant 8 : i32
    %271 = arith.muli %arg0, %c8_i32_102 : i32
    %c5_i32_103 = arith.constant 5 : i32
    %272 = arith.addi %271, %c5_i32_103 : i32
    %c8_i32_104 = arith.constant 8 : i32
    %273 = arith.muli %272, %c8_i32_104 : i32
    %cst_105 = arith.constant 0xFF800000 : f32
    %274 = vector.broadcast %cst_105 : f32 to vector<1x128xf32>
    %c0_i32_106 = arith.constant 0 : i32
    %275 = arith.addi %273, %c0_i32_106 : i32
    %276 = arith.index_cast %275 : i32 to index
    %277 = memref.load %arg1[%276] : memref<64xi32, #tpu.memory_space<smem>>
    %278 = arith.index_cast %277 : i32 to index
    %c0_107 = arith.constant 0 : index
    %279 = vector.load %arg2[%278, %c0_107] : memref<32x128xf32, #tpu.memory_space<vmem>>, vector<1x128xf32>
    %280 = arith.maximumf %274, %279 : vector<1x128xf32>
    %c1_i32_108 = arith.constant 1 : i32
    %281 = arith.addi %273, %c1_i32_108 : i32
    %282 = arith.index_cast %281 : i32 to index
    %283 = memref.load %arg1[%282] : memref<64xi32, #tpu.memory_space<smem>>
    %284 = arith.index_cast %283 : i32 to index
    %c0_109 = arith.constant 0 : index
    %285 = vector.load %arg2[%284, %c0_109] : memref<32x128xf32, #tpu.memory_space<vmem>>, vector<1x128xf32>
    %286 = arith.maximumf %280, %285 : vector<1x128xf32>
    %c2_i32_110 = arith.constant 2 : i32
    %287 = arith.addi %273, %c2_i32_110 : i32
    %288 = arith.index_cast %287 : i32 to index
    %289 = memref.load %arg1[%288] : memref<64xi32, #tpu.memory_space<smem>>
    %290 = arith.index_cast %289 : i32 to index
    %c0_111 = arith.constant 0 : index
    %291 = vector.load %arg2[%290, %c0_111] : memref<32x128xf32, #tpu.memory_space<vmem>>, vector<1x128xf32>
    %292 = arith.maximumf %286, %291 : vector<1x128xf32>
    %c3_i32_112 = arith.constant 3 : i32
    %293 = arith.addi %273, %c3_i32_112 : i32
    %294 = arith.index_cast %293 : i32 to index
    %295 = memref.load %arg1[%294] : memref<64xi32, #tpu.memory_space<smem>>
    %296 = arith.index_cast %295 : i32 to index
    %c0_113 = arith.constant 0 : index
    %297 = vector.load %arg2[%296, %c0_113] : memref<32x128xf32, #tpu.memory_space<vmem>>, vector<1x128xf32>
    %298 = arith.maximumf %292, %297 : vector<1x128xf32>
    %c4_i32_114 = arith.constant 4 : i32
    %299 = arith.addi %273, %c4_i32_114 : i32
    %300 = arith.index_cast %299 : i32 to index
    %301 = memref.load %arg1[%300] : memref<64xi32, #tpu.memory_space<smem>>
    %302 = arith.index_cast %301 : i32 to index
    %c0_115 = arith.constant 0 : index
    %303 = vector.load %arg2[%302, %c0_115] : memref<32x128xf32, #tpu.memory_space<vmem>>, vector<1x128xf32>
    %304 = arith.maximumf %298, %303 : vector<1x128xf32>
    %c5_i32_116 = arith.constant 5 : i32
    %305 = arith.addi %273, %c5_i32_116 : i32
    %306 = arith.index_cast %305 : i32 to index
    %307 = memref.load %arg1[%306] : memref<64xi32, #tpu.memory_space<smem>>
    %308 = arith.index_cast %307 : i32 to index
    %c0_117 = arith.constant 0 : index
    %309 = vector.load %arg2[%308, %c0_117] : memref<32x128xf32, #tpu.memory_space<vmem>>, vector<1x128xf32>
    %310 = arith.maximumf %304, %309 : vector<1x128xf32>
    %c6_i32_118 = arith.constant 6 : i32
    %311 = arith.addi %273, %c6_i32_118 : i32
    %312 = arith.index_cast %311 : i32 to index
    %313 = memref.load %arg1[%312] : memref<64xi32, #tpu.memory_space<smem>>
    %314 = arith.index_cast %313 : i32 to index
    %c0_119 = arith.constant 0 : index
    %315 = vector.load %arg2[%314, %c0_119] : memref<32x128xf32, #tpu.memory_space<vmem>>, vector<1x128xf32>
    %316 = arith.maximumf %310, %315 : vector<1x128xf32>
    %c7_i32_120 = arith.constant 7 : i32
    %317 = arith.addi %273, %c7_i32_120 : i32
    %318 = arith.index_cast %317 : i32 to index
    %319 = memref.load %arg1[%318] : memref<64xi32, #tpu.memory_space<smem>>
    %320 = arith.index_cast %319 : i32 to index
    %c0_121 = arith.constant 0 : index
    %321 = vector.load %arg2[%320, %c0_121] : memref<32x128xf32, #tpu.memory_space<vmem>>, vector<1x128xf32>
    %322 = arith.maximumf %316, %321 : vector<1x128xf32>
    %c8_i32_122 = arith.constant 8 : i32
    %323 = arith.addf %322, %0 : vector<1x128xf32>
    %c5 = arith.constant 5 : index
    %c0_123 = arith.constant 0 : index
    %324 = vector.load %arg4[%c5, %c0_123] : memref<8x128xf32, #tpu.memory_space<vmem>>, vector<1x128xf32>
    tpu.vector_store %arg4[%c5, %c0_123], %323 {strides = array<i32>} : memref<8x128xf32, #tpu.memory_space<vmem>>, vector<1x128xf32>,
    %c8_i32_124 = arith.constant 8 : i32
    %325 = arith.muli %arg0, %c8_i32_124 : i32
    %c6_i32_125 = arith.constant 6 : i32
    %326 = arith.addi %325, %c6_i32_125 : i32
    %c8_i32_126 = arith.constant 8 : i32
    %327 = arith.muli %326, %c8_i32_126 : i32
    %cst_127 = arith.constant 0xFF800000 : f32
    %328 = vector.broadcast %cst_127 : f32 to vector<1x128xf32>
    %c0_i32_128 = arith.constant 0 : i32
    %329 = arith.addi %327, %c0_i32_128 : i32
    %330 = arith.index_cast %329 : i32 to index
    %331 = memref.load %arg1[%330] : memref<64xi32, #tpu.memory_space<smem>>
    %332 = arith.index_cast %331 : i32 to index
    %c0_129 = arith.constant 0 : index
    %333 = vector.load %arg2[%332, %c0_129] : memref<32x128xf32, #tpu.memory_space<vmem>>, vector<1x128xf32>
    %334 = arith.maximumf %328, %333 : vector<1x128xf32>
    %c1_i32_130 = arith.constant 1 : i32
    %335 = arith.addi %327, %c1_i32_130 : i32
    %336 = arith.index_cast %335 : i32 to index
    %337 = memref.load %arg1[%336] : memref<64xi32, #tpu.memory_space<smem>>
    %338 = arith.index_cast %337 : i32 to index
    %c0_131 = arith.constant 0 : index
    %339 = vector.load %arg2[%338, %c0_131] : memref<32x128xf32, #tpu.memory_space<vmem>>, vector<1x128xf32>
    %340 = arith.maximumf %334, %339 : vector<1x128xf32>
    %c2_i32_132 = arith.constant 2 : i32
    %341 = arith.addi %327, %c2_i32_132 : i32
    %342 = arith.index_cast %341 : i32 to index
    %343 = memref.load %arg1[%342] : memref<64xi32, #tpu.memory_space<smem>>
    %344 = arith.index_cast %343 : i32 to index
    %c0_133 = arith.constant 0 : index
    %345 = vector.load %arg2[%344, %c0_133] : memref<32x128xf32, #tpu.memory_space<vmem>>, vector<1x128xf32>
    %346 = arith.maximumf %340, %345 : vector<1x128xf32>
    %c3_i32_134 = arith.constant 3 : i32
    %347 = arith.addi %327, %c3_i32_134 : i32
    %348 = arith.index_cast %347 : i32 to index
    %349 = memref.load %arg1[%348] : memref<64xi32, #tpu.memory_space<smem>>
    %350 = arith.index_cast %349 : i32 to index
    %c0_135 = arith.constant 0 : index
    %351 = vector.load %arg2[%350, %c0_135] : memref<32x128xf32, #tpu.memory_space<vmem>>, vector<1x128xf32>
    %352 = arith.maximumf %346, %351 : vector<1x128xf32>
    %c4_i32_136 = arith.constant 4 : i32
    %353 = arith.addi %327, %c4_i32_136 : i32
    %354 = arith.index_cast %353 : i32 to index
    %355 = memref.load %arg1[%354] : memref<64xi32, #tpu.memory_space<smem>>
    %356 = arith.index_cast %355 : i32 to index
    %c0_137 = arith.constant 0 : index
    %357 = vector.load %arg2[%356, %c0_137] : memref<32x128xf32, #tpu.memory_space<vmem>>, vector<1x128xf32>
    %358 = arith.maximumf %352, %357 : vector<1x128xf32>
    %c5_i32_138 = arith.constant 5 : i32
    %359 = arith.addi %327, %c5_i32_138 : i32
    %360 = arith.index_cast %359 : i32 to index
    %361 = memref.load %arg1[%360] : memref<64xi32, #tpu.memory_space<smem>>
    %362 = arith.index_cast %361 : i32 to index
    %c0_139 = arith.constant 0 : index
    %363 = vector.load %arg2[%362, %c0_139] : memref<32x128xf32, #tpu.memory_space<vmem>>, vector<1x128xf32>
    %364 = arith.maximumf %358, %363 : vector<1x128xf32>
    %c6_i32_140 = arith.constant 6 : i32
    %365 = arith.addi %327, %c6_i32_140 : i32
    %366 = arith.index_cast %365 : i32 to index
    %367 = memref.load %arg1[%366] : memref<64xi32, #tpu.memory_space<smem>>
    %368 = arith.index_cast %367 : i32 to index
    %c0_141 = arith.constant 0 : index
    %369 = vector.load %arg2[%368, %c0_141] : memref<32x128xf32, #tpu.memory_space<vmem>>, vector<1x128xf32>
    %370 = arith.maximumf %364, %369 : vector<1x128xf32>
    %c7_i32_142 = arith.constant 7 : i32
    %371 = arith.addi %327, %c7_i32_142 : i32
    %372 = arith.index_cast %371 : i32 to index
    %373 = memref.load %arg1[%372] : memref<64xi32, #tpu.memory_space<smem>>
    %374 = arith.index_cast %373 : i32 to index
    %c0_143 = arith.constant 0 : index
    %375 = vector.load %arg2[%374, %c0_143] : memref<32x128xf32, #tpu.memory_space<vmem>>, vector<1x128xf32>
    %376 = arith.maximumf %370, %375 : vector<1x128xf32>
    %c8_i32_144 = arith.constant 8 : i32
    %377 = arith.addf %376, %0 : vector<1x128xf32>
    %c6 = arith.constant 6 : index
    %c0_145 = arith.constant 0 : index
    %378 = vector.load %arg4[%c6, %c0_145] : memref<8x128xf32, #tpu.memory_space<vmem>>, vector<1x128xf32>
    tpu.vector_store %arg4[%c6, %c0_145], %377 {strides = array<i32>} : memref<8x128xf32, #tpu.memory_space<vmem>>, vector<1x128xf32>,
    %c8_i32_146 = arith.constant 8 : i32
    %379 = arith.muli %arg0, %c8_i32_146 : i32
    %c7_i32_147 = arith.constant 7 : i32
    %380 = arith.addi %379, %c7_i32_147 : i32
    %c8_i32_148 = arith.constant 8 : i32
    %381 = arith.muli %380, %c8_i32_148 : i32
    %cst_149 = arith.constant 0xFF800000 : f32
    %382 = vector.broadcast %cst_149 : f32 to vector<1x128xf32>
    %c0_i32_150 = arith.constant 0 : i32
    %383 = arith.addi %381, %c0_i32_150 : i32
    %384 = arith.index_cast %383 : i32 to index
    %385 = memref.load %arg1[%384] : memref<64xi32, #tpu.memory_space<smem>>
    %386 = arith.index_cast %385 : i32 to index
    %c0_151 = arith.constant 0 : index
    %387 = vector.load %arg2[%386, %c0_151] : memref<32x128xf32, #tpu.memory_space<vmem>>, vector<1x128xf32>
    %388 = arith.maximumf %382, %387 : vector<1x128xf32>
    %c1_i32_152 = arith.constant 1 : i32
    %389 = arith.addi %381, %c1_i32_152 : i32
    %390 = arith.index_cast %389 : i32 to index
    %391 = memref.load %arg1[%390] : memref<64xi32, #tpu.memory_space<smem>>
    %392 = arith.index_cast %391 : i32 to index
    %c0_153 = arith.constant 0 : index
    %393 = vector.load %arg2[%392, %c0_153] : memref<32x128xf32, #tpu.memory_space<vmem>>, vector<1x128xf32>
    %394 = arith.maximumf %388, %393 : vector<1x128xf32>
    %c2_i32_154 = arith.constant 2 : i32
    %395 = arith.addi %381, %c2_i32_154 : i32
    %396 = arith.index_cast %395 : i32 to index
    %397 = memref.load %arg1[%396] : memref<64xi32, #tpu.memory_space<smem>>
    %398 = arith.index_cast %397 : i32 to index
    %c0_155 = arith.constant 0 : index
    %399 = vector.load %arg2[%398, %c0_155] : memref<32x128xf32, #tpu.memory_space<vmem>>, vector<1x128xf32>
    %400 = arith.maximumf %394, %399 : vector<1x128xf32>
    %c3_i32_156 = arith.constant 3 : i32
    %401 = arith.addi %381, %c3_i32_156 : i32
    %402 = arith.index_cast %401 : i32 to index
    %403 = memref.load %arg1[%402] : memref<64xi32, #tpu.memory_space<smem>>
    %404 = arith.index_cast %403 : i32 to index
    %c0_157 = arith.constant 0 : index
    %405 = vector.load %arg2[%404, %c0_157] : memref<32x128xf32, #tpu.memory_space<vmem>>, vector<1x128xf32>
    %406 = arith.maximumf %400, %405 : vector<1x128xf32>
    %c4_i32_158 = arith.constant 4 : i32
    %407 = arith.addi %381, %c4_i32_158 : i32
    %408 = arith.index_cast %407 : i32 to index
    %409 = memref.load %arg1[%408] : memref<64xi32, #tpu.memory_space<smem>>
    %410 = arith.index_cast %409 : i32 to index
    %c0_159 = arith.constant 0 : index
    %411 = vector.load %arg2[%410, %c0_159] : memref<32x128xf32, #tpu.memory_space<vmem>>, vector<1x128xf32>
    %412 = arith.maximumf %406, %411 : vector<1x128xf32>
    %c5_i32_160 = arith.constant 5 : i32
    %413 = arith.addi %381, %c5_i32_160 : i32
    %414 = arith.index_cast %413 : i32 to index
    %415 = memref.load %arg1[%414] : memref<64xi32, #tpu.memory_space<smem>>
    %416 = arith.index_cast %415 : i32 to index
    %c0_161 = arith.constant 0 : index
    %417 = vector.load %arg2[%416, %c0_161] : memref<32x128xf32, #tpu.memory_space<vmem>>, vector<1x128xf32>
    %418 = arith.maximumf %412, %417 : vector<1x128xf32>
    %c6_i32_162 = arith.constant 6 : i32
    %419 = arith.addi %381, %c6_i32_162 : i32
    %420 = arith.index_cast %419 : i32 to index
    %421 = memref.load %arg1[%420] : memref<64xi32, #tpu.memory_space<smem>>
    %422 = arith.index_cast %421 : i32 to index
    %c0_163 = arith.constant 0 : index
    %423 = vector.load %arg2[%422, %c0_163] : memref<32x128xf32, #tpu.memory_space<vmem>>, vector<1x128xf32>
    %424 = arith.maximumf %418, %423 : vector<1x128xf32>
    %c7_i32_164 = arith.constant 7 : i32
    %425 = arith.addi %381, %c7_i32_164 : i32
    %426 = arith.index_cast %425 : i32 to index
    %427 = memref.load %arg1[%426] : memref<64xi32, #tpu.memory_space<smem>>
    %428 = arith.index_cast %427 : i32 to index
    %c0_165 = arith.constant 0 : index
    %429 = vector.load %arg2[%428, %c0_165] : memref<32x128xf32, #tpu.memory_space<vmem>>, vector<1x128xf32>
    %430 = arith.maximumf %424, %429 : vector<1x128xf32>
    %c8_i32_166 = arith.constant 8 : i32
    %431 = arith.addf %430, %0 : vector<1x128xf32>
    %c7 = arith.constant 7 : index
    %c0_167 = arith.constant 0 : index
    %432 = vector.load %arg4[%c7, %c0_167] : memref<8x128xf32, #tpu.memory_space<vmem>>, vector<1x128xf32>
    tpu.vector_store %arg4[%c7, %c0_167], %431 {strides = array<i32>} : memref<8x128xf32, #tpu.memory_space<vmem>>, vector<1x128xf32>,
    return
  }
  func.func @transform_0(%arg0: i32, %arg1: memref<64xi32, #tpu.memory_space<smem>>) -> (i32, i32) {
    %c0_i32 = arith.constant 0 : i32
    %c0_i32_0 = arith.constant 0 : i32
    %c0_i32_1 = arith.constant 0 : i32
    return %c0_i32, %c0_i32_0 : i32, i32
  }
  func.func @transform_1(%arg0: i32, %arg1: memref<64xi32, #tpu.memory_space<smem>>) -> (i32, i32) {
    %c0_i32 = arith.constant 0 : i32
    %c0_i32_0 = arith.constant 0 : i32
    %c0_i32_1 = arith.constant 0 : i32
    return %c0_i32, %c0_i32_0 : i32, i32
  }
  func.func @transform_2(%arg0: i32, %arg1: memref<64xi32, #tpu.memory_space<smem>>) -> (i32, i32) {
    %c0_i32 = arith.constant 0 : i32
    %c0_i32_0 = arith.constant 0 : i32
    return %arg0, %c0_i32 : i32, i32
  }
}

</mosaic_0001>

<llo_original>
// kernel: tpu_custom_call.1
$region0: #{tpu_custom_call.1}
  #allocation0 [shape = 'u32[]', space=smem, size = 0x4, offset = 0x4, fixed_abs, tag = 'smem constant byte address 0x4 - core index']
  #allocation1 [shape = 'u32[72,128]{1,0:T(1,128)}', space=vmem, size = 0x9000, scoped, tag = 'internal scratch']
  #allocation2 [shape = 's32[1]{0}', space=sflag, size = 0x4, scoped, tag = 'scoped memory for tpu_custom_call.1']
  #allocation3 [shape = 'u8[512]{0}', space=smem, size = 0x200, scoped, tag = 'prefetched SMEM operand 0']
  %s0 = inlined_call_operand.hbm [shape: s32[64], index: 0, kind: input, shape index: {}]
  %s1 = inlined_call_operand.hbm [shape: f32[32,128], index: 1, kind: input, shape index: {}]
  %s2 = inlined_call_operand.vmem [shape: f32[1,128], index: 2, kind: input, shape index: {}]
  %s3 = inlined_call_operand.hbm [shape: f32[8,128], index: 3, kind: output, shape index: {}]
  %s4 = sld [smem:[#allocation0]]
  $region22: #{tpu_custom_call.1} parent=0
    _
  %s6 = ssub.s32 1, %s4
  %s7 = scalar_select 0, %s6, %s4
  %s9 = sshll.u32 %s0, 4
  %s10 = int_to_ptr.hbm [resolvable:$true] %s9
  %12 = dma.hbm_to_smem %s10, 16, [#allocation3], [#allocation2]
  %14 = dma.done [#allocation2], 16
  %15 = sfence
  $region1: #{tpu_custom_call.1} parent=0
    #allocation4 [shape = 'u8[16384]{0}', space=vmem, size = 0x4000, scoped, tag = 'input window, operand 1, single buffered']
    #allocation5 [shape = 's32[1]{0}', space=sflag, size = 0x4, scoped, tag = 'scoped memory for tpu_custom_call.1']
    #allocation6 [shape = 's32[1]{0}', space=sflag, size = 0x4, scoped, tag = 'scoped memory for tpu_custom_call.1']
    #allocation7 [shape = 'u8[4096]{0}', space=vmem, size = 0x1000, scoped, tag = 'output window, operand 0, single buffered']
    %16 = vsyncpa [#allocation5], 0
    %17 = vsyncpa [#allocation6], 0
    // Predicated region
    $region2: #{tpu_custom_call.1} parent=1 // pred_check
      _
    $region3: #{tpu_custom_call.1} parent=1 // pred_check_branch
      %19 = sbr.rel (0) target = $region5
    $region4: #{tpu_custom_call.1} parent=1 // pred_region
      %21 = vsyncadd [#allocation5], 0
      %s22 = sshll.u32 %s1, 4
      %s23 = int_to_ptr.hbm [resolvable:$true] %s22
      %s24 = sshll.u32 [#allocation4], 4
      %s25 = int_to_ptr.vmem [resolvable:$true] %s24
      %30 = dma.hbm_to_vmem [thread:$0]  %s23, 512, %s25, [#allocation5], 128, 128, 8
    $region5: #{tpu_custom_call.1} parent=1 // pred_fallthru
      _
    // Predicated region
    $region6: #{tpu_custom_call.1} parent=1 // pred_check
      _
    $region7: #{tpu_custom_call.1} parent=1 // pred_check_branch
      %32 = sbr.rel (0) target = $region9
    $region8: #{tpu_custom_call.1} parent=1 // pred_region
      _
    $region9: #{tpu_custom_call.1} parent=1 // pred_fallthru
      _
    // Predicated region
    $region10: #{tpu_custom_call.1} parent=1 // pred_check
      _
    $region11: #{tpu_custom_call.1} parent=1 // pred_check_branch
      %34 = sbr.rel (0) target = $region13
    $region12: #{tpu_custom_call.1} parent=1 // pred_region
      %36 = dma.done [#allocation5], 512
    $region13: #{tpu_custom_call.1} parent=1 // pred_fallthru
      _
    %v37 = vld [vmem:[%s2] sm:$0x1]
    %s38 = smul.u32 0, 64
    %s39 = sld [smem:[#allocation3 + %s38]]
    %s40 = scalar_lea.vmem [#allocation4], %s39
    %v41 = vld [vmem:[%s40] sm:$0x1]
    %s42 = sadd.s32 %s38, 1
    %s43 = sld [smem:[#allocation3 + %s42]]
    %s44 = scalar_lea.vmem [#allocation4], %s43
    %v45 = vld [vmem:[%s44] sm:$0x1]
    %v46 = vmax.f32 %v41, %v45
    %s47 = sadd.s32 %s38, 2
    %s48 = sld [smem:[#allocation3 + %s47]]
    %s49 = scalar_lea.vmem [#allocation4], %s48
    %v50 = vld [vmem:[%s49] sm:$0x1]
    %v51 = vmax.f32 %v46, %v50
    %s52 = sadd.s32 %s38, 3
    %s53 = sld [smem:[#allocation3 + %s52]]
    %s54 = scalar_lea.vmem [#allocation4], %s53
    %v55 = vld [vmem:[%s54] sm:$0x1]
    %v56 = vmax.f32 %v51, %v55
    %s57 = sadd.s32 %s38, 4
    %s58 = sld [smem:[#allocation3 + %s57]]
    %s59 = scalar_lea.vmem [#allocation4], %s58
    %v60 = vld [vmem:[%s59] sm:$0x1]
    %v61 = vmax.f32 %v56, %v60
    %s62 = sadd.s32 %s38, 5
    %s63 = sld [smem:[#allocation3 + %s62]]
    %s64 = scalar_lea.vmem [#allocation4], %s63
    %v65 = vld [vmem:[%s64] sm:$0x1]
    %v66 = vmax.f32 %v61, %v65
    %s67 = sadd.s32 %s38, 6
    %s68 = sld [smem:[#allocation3 + %s67]]
    %s69 = scalar_lea.vmem [#allocation4], %s68
    %v70 = vld [vmem:[%s69] sm:$0x1]
    %v71 = vmax.f32 %v66, %v70
    %s72 = sadd.s32 %s38, 7
    %s73 = sld [smem:[#allocation3 + %s72]]
    %s74 = scalar_lea.vmem [#allocation4], %s73
    %v75 = vld [vmem:[%s74] sm:$0x1]
    %v76 = vmax.f32 %v71, %v75
    %v77 = vadd.f32 %v76, %v37
    %78 = vst [vmem:[#allocation7] sm:$0x1] %v77
    %s79 = smul.u32 0, 8
    %s80 = sadd.s32 %s79, 1
    %s81 = smul.u32 %s80, 8
    %s82 = sld [smem:[#allocation3 + %s81]]
    %s83 = scalar_lea.vmem [#allocation4], %s82
    %v84 = vld [vmem:[%s83] sm:$0x1]
    %s85 = sadd.s32 %s81, 1
    %s86 = sld [smem:[#allocation3 + %s85]]
    %s87 = scalar_lea.vmem [#allocation4], %s86
    %v88 = vld [vmem:[%s87] sm:$0x1]
    %v89 = vmax.f32 %v84, %v88
    %s90 = sadd.s32 %s81, 2
    %s91 = sld [smem:[#allocation3 + %s90]]
    %s92 = scalar_lea.vmem [#allocation4], %s91
    %v93 = vld [vmem:[%s92] sm:$0x1]
    %v94 = vmax.f32 %v89, %v93
    %s95 = sadd.s32 %s81, 3
    %s96 = sld [smem:[#allocation3 + %s95]]
    %s97 = scalar_lea.vmem [#allocation4], %s96
    %v98 = vld [vmem:[%s97] sm:$0x1]
    %v99 = vmax.f32 %v94, %v98
    %s100 = sadd.s32 %s81, 4
    %s101 = sld [smem:[#allocation3 + %s100]]
    %s102 = scalar_lea.vmem [#allocation4], %s101
    %v103 = vld [vmem:[%s102] sm:$0x1]
    %v104 = vmax.f32 %v99, %v103
    %s105 = sadd.s32 %s81, 5
    %s106 = sld [smem:[#allocation3 + %s105]]
    %s107 = scalar_lea.vmem [#allocation4], %s106
    %v108 = vld [vmem:[%s107] sm:$0x1]
    %v109 = vmax.f32 %v104, %v108
    %s110 = sadd.s32 %s81, 6
    %s111 = sld [smem:[#allocation3 + %s110]]
    %s112 = scalar_lea.vmem [#allocation4], %s111
    %v113 = vld [vmem:[%s112] sm:$0x1]
    %v114 = vmax.f32 %v109, %v113
    %s115 = sadd.s32 %s81, 7
    %s116 = sld [smem:[#allocation3 + %s115]]
    %s117 = scalar_lea.vmem [#allocation4], %s116
    %v118 = vld [vmem:[%s117] sm:$0x1]
    %v119 = vmax.f32 %v114, %v118
    %v120 = vadd.f32 %v119, %v37
    %121 = vst [vmem:[#allocation7 + $0x1] sm:$0x1] %v120
    %s122 = sadd.s32 %s79, 2
    %s123 = smul.u32 %s122, 8
    %s124 = sld [smem:[#allocation3 + %s123]]
    %s125 = scalar_lea.vmem [#allocation4], %s124
    %v126 = vld [vmem:[%s125] sm:$0x1]
    %s127 = sadd.s32 %s123, 1
    %s128 = sld [smem:[#allocation3 + %s127]]
    %s129 = scalar_lea.vmem [#allocation4], %s128
    %v130 = vld [vmem:[%s129] sm:$0x1]
    %v131 = vmax.f32 %v126, %v130
    %s132 = sadd.s32 %s123, 2
    %s133 = sld [smem:[#allocation3 + %s132]]
    %s134 = scalar_lea.vmem [#allocation4], %s133
    %v135 = vld [vmem:[%s134] sm:$0x1]
    %v136 = vmax.f32 %v131, %v135
    %s137 = sadd.s32 %s123, 3
    %s138 = sld [smem:[#allocation3 + %s137]]
    %s139 = scalar_lea.vmem [#allocation4], %s138
    %v140 = vld [vmem:[%s139] sm:$0x1]
    %v141 = vmax.f32 %v136, %v140
    %s142 = sadd.s32 %s123, 4
    %s143 = sld [smem:[#allocation3 + %s142]]
    %s144 = scalar_lea.vmem [#allocation4], %s143
    %v145 = vld [vmem:[%s144] sm:$0x1]
    %v146 = vmax.f32 %v141, %v145
    %s147 = sadd.s32 %s123, 5
    %s148 = sld [smem:[#allocation3 + %s147]]
    %s149 = scalar_lea.vmem [#allocation4], %s148
    %v150 = vld [vmem:[%s149] sm:$0x1]
    %v151 = vmax.f32 %v146, %v150
    %s152 = sadd.s32 %s123, 6
    %s153 = sld [smem:[#allocation3 + %s152]]
    %s154 = scalar_lea.vmem [#allocation4], %s153
    %v155 = vld [vmem:[%s154] sm:$0x1]
    %v156 = vmax.f32 %v151, %v155
    %s157 = sadd.s32 %s123, 7
    %s158 = sld [smem:[#allocation3 + %s157]]
    %s159 = scalar_lea.vmem [#allocation4], %s158
    %v160 = vld [vmem:[%s159] sm:$0x1]
    %v161 = vmax.f32 %v156, %v160
    %v162 = vadd.f32 %v161, %v37
    %163 = vst [vmem:[#allocation7 + $0x2] sm:$0x1] %v162
    %s164 = sadd.s32 %s79, 3
    %s165 = smul.u32 %s164, 8
    %s166 = sld [smem:[#allocation3 + %s165]]
    %s167 = scalar_lea.vmem [#allocation4], %s166
    %v168 = vld [vmem:[%s167] sm:$0x1]
    %s169 = sadd.s32 %s165, 1
    %s170 = sld [smem:[#allocation3 + %s169]]
    %s171 = scalar_lea.vmem [#allocation4], %s170
    %v172 = vld [vmem:[%s171] sm:$0x1]
    %v173 = vmax.f32 %v168, %v172
    %s174 = sadd.s32 %s165, 2
    %s175 = sld [smem:[#allocation3 + %s174]]
    %s176 = scalar_lea.vmem [#allocation4], %s175
    %v177 = vld [vmem:[%s176] sm:$0x1]
    %v178 = vmax.f32 %v173, %v177
    %s179 = sadd.s32 %s165, 3
    %s180 = sld [smem:[#allocation3 + %s179]]
    %s181 = scalar_lea.vmem [#allocation4], %s180
    %v182 = vld [vmem:[%s181] sm:$0x1]
    %v183 = vmax.f32 %v178, %v182
    %s184 = sadd.s32 %s165, 4
    %s185 = sld [smem:[#allocation3 + %s184]]
    %s186 = scalar_lea.vmem [#allocation4], %s185
    %v187 = vld [vmem:[%s186] sm:$0x1]
    %v188 = vmax.f32 %v183, %v187
    %s189 = sadd.s32 %s165, 5
    %s190 = sld [smem:[#allocation3 + %s189]]
    %s191 = scalar_lea.vmem [#allocation4], %s190
    %v192 = vld [vmem:[%s191] sm:$0x1]
    %v193 = vmax.f32 %v188, %v192
    %s194 = sadd.s32 %s165, 6
    %s195 = sld [smem:[#allocation3 + %s194]]
    %s196 = scalar_lea.vmem [#allocation4], %s195
    %v197 = vld [vmem:[%s196] sm:$0x1]
    %v198 = vmax.f32 %v193, %v197
    %s199 = sadd.s32 %s165, 7
    %s200 = sld [smem:[#allocation3 + %s199]]
    %s201 = scalar_lea.vmem [#allocation4], %s200
    %v202 = vld [vmem:[%s201] sm:$0x1]
    %v203 = vmax.f32 %v198, %v202
    %v204 = vadd.f32 %v203, %v37
    %205 = vst [vmem:[#allocation7 + $0x3] sm:$0x1] %v204
    %s206 = sadd.s32 %s79, 4
    %s207 = smul.u32 %s206, 8
    %s208 = sld [smem:[#allocation3 + %s207]]
    %s209 = scalar_lea.vmem [#allocation4], %s208
    %v210 = vld [vmem:[%s209] sm:$0x1]
    %s211 = sadd.s32 %s207, 1
    %s212 = sld [smem:[#allocation3 + %s211]]
    %s213 = scalar_lea.vmem [#allocation4], %s212
    %v214 = vld [vmem:[%s213] sm:$0x1]
    %v215 = vmax.f32 %v210, %v214
    %s216 = sadd.s32 %s207, 2
    %s217 = sld [smem:[#allocation3 + %s216]]
    %s218 = scalar_lea.vmem [#allocation4], %s217
    %v219 = vld [vmem:[%s218] sm:$0x1]
    %v220 = vmax.f32 %v215, %v219
    %s221 = sadd.s32 %s207, 3
    %s222 = sld [smem:[#allocation3 + %s221]]
    %s223 = scalar_lea.vmem [#allocation4], %s222
    %v224 = vld [vmem:[%s223] sm:$0x1]
    %v225 = vmax.f32 %v220, %v224
    %s226 = sadd.s32 %s207, 4
    %s227 = sld [smem:[#allocation3 + %s226]]
    %s228 = scalar_lea.vmem [#allocation4], %s227
    %v229 = vld [vmem:[%s228] sm:$0x1]
    %v230 = vmax.f32 %v225, %v229
    %s231 = sadd.s32 %s207, 5
    %s232 = sld [smem:[#allocation3 + %s231]]
    %s233 = scalar_lea.vmem [#allocation4], %s232
    %v234 = vld [vmem:[%s233] sm:$0x1]
    %v235 = vmax.f32 %v230, %v234
    %s236 = sadd.s32 %s207, 6
    %s237 = sld [smem:[#allocation3 + %s236]]
    %s238 = scalar_lea.vmem [#allocation4], %s237
    %v239 = vld [vmem:[%s238] sm:$0x1]
    %v240 = vmax.f32 %v235, %v239
    %s241 = sadd.s32 %s207, 7
    %s242 = sld [smem:[#allocation3 + %s241]]
    %s243 = scalar_lea.vmem [#allocation4], %s242
    %v244 = vld [vmem:[%s243] sm:$0x1]
    %v245 = vmax.f32 %v240, %v244
    %v246 = vadd.f32 %v245, %v37
    %247 = vst [vmem:[#allocation7 + $0x4] sm:$0x1] %v246
    %s248 = sadd.s32 %s79, 5
    %s249 = smul.u32 %s248, 8
    %s250 = sld [smem:[#allocation3 + %s249]]
    %s251 = scalar_lea.vmem [#allocation4], %s250
    %v252 = vld [vmem:[%s251] sm:$0x1]
    %s253 = sadd.s32 %s249, 1
    %s254 = sld [smem:[#allocation3 + %s253]]
    %s255 = scalar_lea.vmem [#allocation4], %s254
    %v256 = vld [vmem:[%s255] sm:$0x1]
    %v257 = vmax.f32 %v252, %v256
    %s258 = sadd.s32 %s249, 2
    %s259 = sld [smem:[#allocation3 + %s258]]
    %s260 = scalar_lea.vmem [#allocation4], %s259
    %v261 = vld [vmem:[%s260] sm:$0x1]
    %v262 = vmax.f32 %v257, %v261
    %s263 = sadd.s32 %s249, 3
    %s264 = sld [smem:[#allocation3 + %s263]]
    %s265 = scalar_lea.vmem [#allocation4], %s264
    %v266 = vld [vmem:[%s265] sm:$0x1]
    %v267 = vmax.f32 %v262, %v266
    %s268 = sadd.s32 %s249, 4
    %s269 = sld [smem:[#allocation3 + %s268]]
    %s270 = scalar_lea.vmem [#allocation4], %s269
    %v271 = vld [vmem:[%s270] sm:$0x1]
    %v272 = vmax.f32 %v267, %v271
    %s273 = sadd.s32 %s249, 5
    %s274 = sld [smem:[#allocation3 + %s273]]
    %s275 = scalar_lea.vmem [#allocation4], %s274
    %v276 = vld [vmem:[%s275] sm:$0x1]
    %v277 = vmax.f32 %v272, %v276
    %s278 = sadd.s32 %s249, 6
    %s279 = sld [smem:[#allocation3 + %s278]]
    %s280 = scalar_lea.vmem [#allocation4], %s279
    %v281 = vld [vmem:[%s280] sm:$0x1]
    %v282 = vmax.f32 %v277, %v281
    %s283 = sadd.s32 %s249, 7
    %s284 = sld [smem:[#allocation3 + %s283]]
    %s285 = scalar_lea.vmem [#allocation4], %s284
    %v286 = vld [vmem:[%s285] sm:$0x1]
    %v287 = vmax.f32 %v282, %v286
    %v288 = vadd.f32 %v287, %v37
    %289 = vst [vmem:[#allocation7 + $0x5] sm:$0x1] %v288
    %s290 = sadd.s32 %s79, 6
    %s291 = smul.u32 %s290, 8
    %s292 = sld [smem:[#allocation3 + %s291]]
    %s293 = scalar_lea.vmem [#allocation4], %s292
    %v294 = vld [vmem:[%s293] sm:$0x1]
    %s295 = sadd.s32 %s291, 1
    %s296 = sld [smem:[#allocation3 + %s295]]
    %s297 = scalar_lea.vmem [#allocation4], %s296
    %v298 = vld [vmem:[%s297] sm:$0x1]
    %v299 = vmax.f32 %v294, %v298
    %s300 = sadd.s32 %s291, 2
    %s301 = sld [smem:[#allocation3 + %s300]]
    %s302 = scalar_lea.vmem [#allocation4], %s301
    %v303 = vld [vmem:[%s302] sm:$0x1]
    %v304 = vmax.f32 %v299, %v303
    %s305 = sadd.s32 %s291, 3
    %s306 = sld [smem:[#allocation3 + %s305]]
    %s307 = scalar_lea.vmem [#allocation4], %s306
    %v308 = vld [vmem:[%s307] sm:$0x1]
    %v309 = vmax.f32 %v304, %v308
    %s310 = sadd.s32 %s291, 4
    %s311 = sld [smem:[#allocation3 + %s310]]
    %s312 = scalar_lea.vmem [#allocation4], %s311
    %v313 = vld [vmem:[%s312] sm:$0x1]
    %v314 = vmax.f32 %v309, %v313
    %s315 = sadd.s32 %s291, 5
    %s316 = sld [smem:[#allocation3 + %s315]]
    %s317 = scalar_lea.vmem [#allocation4], %s316
    %v318 = vld [vmem:[%s317] sm:$0x1]
    %v319 = vmax.f32 %v314, %v318
    %s320 = sadd.s32 %s291, 6
    %s321 = sld [smem:[#allocation3 + %s320]]
    %s322 = scalar_lea.vmem [#allocation4], %s321
    %v323 = vld [vmem:[%s322] sm:$0x1]
    %v324 = vmax.f32 %v319, %v323
    %s325 = sadd.s32 %s291, 7
    %s326 = sld [smem:[#allocation3 + %s325]]
    %s327 = scalar_lea.vmem [#allocation4], %s326
    %v328 = vld [vmem:[%s327] sm:$0x1]
    %v329 = vmax.f32 %v324, %v328
    %v330 = vadd.f32 %v329, %v37
    %331 = vst [vmem:[#allocation7 + $0x6] sm:$0x1] %v330
    %s332 = sadd.s32 %s79, 7
    %s333 = smul.u32 %s332, 8
    %s334 = sld [smem:[#allocation3 + %s333]]
    %s335 = scalar_lea.vmem [#allocation4], %s334
    %v336 = vld [vmem:[%s335] sm:$0x1]
    %s337 = sadd.s32 %s333, 1
    %s338 = sld [smem:[#allocation3 + %s337]]
    %s339 = scalar_lea.vmem [#allocation4], %s338
    %v340 = vld [vmem:[%s339] sm:$0x1]
    %v341 = vmax.f32 %v336, %v340
    %s342 = sadd.s32 %s333, 2
    %s343 = sld [smem:[#allocation3 + %s342]]
    %s344 = scalar_lea.vmem [#allocation4], %s343
    %v345 = vld [vmem:[%s344] sm:$0x1]
    %v346 = vmax.f32 %v341, %v345
    %s347 = sadd.s32 %s333, 3
    %s348 = sld [smem:[#allocation3 + %s347]]
    %s349 = scalar_lea.vmem [#allocation4], %s348
    %v350 = vld [vmem:[%s349] sm:$0x1]
    %v351 = vmax.f32 %v346, %v350
    %s352 = sadd.s32 %s333, 4
    %s353 = sld [smem:[#allocation3 + %s352]]
    %s354 = scalar_lea.vmem [#allocation4], %s353
    %v355 = vld [vmem:[%s354] sm:$0x1]
    %v356 = vmax.f32 %v351, %v355
    %s357 = sadd.s32 %s333, 5
    %s358 = sld [smem:[#allocation3 + %s357]]
    %s359 = scalar_lea.vmem [#allocation4], %s358
    %v360 = vld [vmem:[%s359] sm:$0x1]
    %v361 = vmax.f32 %v356, %v360
    %s362 = sadd.s32 %s333, 6
    %s363 = sld [smem:[#allocation3 + %s362]]
    %s364 = scalar_lea.vmem [#allocation4], %s363
    %v365 = vld [vmem:[%s364] sm:$0x1]
    %v366 = vmax.f32 %v361, %v365
    %s367 = sadd.s32 %s333, 7
    %s368 = sld [smem:[#allocation3 + %s367]]
    %s369 = scalar_lea.vmem [#allocation4], %s368
    %v370 = vld [vmem:[%s369] sm:$0x1]
    %v371 = vmax.f32 %v366, %v370
    %v372 = vadd.f32 %v371, %v37
    %373 = vst [vmem:[#allocation7 + $0x7] sm:$0x1] %v372
    // Predicated region
    $region14: #{tpu_custom_call.1} parent=1 // pred_check
      _
    $region15: #{tpu_custom_call.1} parent=1 // pred_check_branch
      %375 = sbr.rel (0) target = $region17
    $region16: #{tpu_custom_call.1} parent=1 // pred_region
      %377 = vsyncadd [#allocation6], 0
      %s379 = sshll.u32 [#allocation7], 4
      %s380 = int_to_ptr.vmem [resolvable:$true] %s379
      %s381 = sshll.u32 %s3, 4
      %s382 = int_to_ptr.hbm [resolvable:$true] %s381
      %384 = dma.vmem_to_hbm [thread:$0]  %s380, 128, %s382, [#allocation6]
    $region17: #{tpu_custom_call.1} parent=1 // pred_fallthru
      _
    // Predicated region
    $region18: #{tpu_custom_call.1} parent=1 // pred_check
      _
    $region19: #{tpu_custom_call.1} parent=1 // pred_check_branch
      %386 = sbr.rel (0) target = $region21
    $region20: #{tpu_custom_call.1} parent=1 // pred_region
      %388 = dma.done [#allocation6], 128
    $region21: #{tpu_custom_call.1} parent=1 // pred_fallthru
      _
    %389 = vsyncpa [#allocation5], 1
    %390 = vsyncpa [#allocation6], 1

</llo_original>
